<compile_context>
chip_gen: v7x
topology: tpu7x:2x2x1
jax: 0.10.0
libtpu: 0.0.40
codegen_flags: <defaults>
</compile_context>

<pallas_src>
import functools

import jax
import jax.numpy as jnp
from jax.experimental import pallas as pl
from jax.experimental.pallas import tpu as pltpu

IGNORE_INDEX = -100


def _ce_kernel(logits_ref, targets_ref, out_ref, m_s, l_s, p_s):
    """One (row_tile, class_tile) block; streaming LSE over the class axis.

    Scratch (persist across the class grid axis, re-init at class step 0):
      m_s: (row_tile, 1) running max
      l_s: (row_tile, 1) running sum of exp(logit - running_max)
      p_s: (row_tile, 1) gathered target logit (raw)
    """
    j = pl.program_id(1)
    n_class_tiles = pl.num_programs(1)

    @pl.when(j == 0)
    def _():
        m_s[...] = jnp.full_like(m_s, -jnp.inf)
        l_s[...] = jnp.zeros_like(l_s)
        p_s[...] = jnp.zeros_like(p_s)

    logits = logits_ref[...].astype(jnp.float32)          # (TN, TC) f32 math
    tgt = targets_ref[...]                                 # (TN, 1) int32
    tn, tc = logits.shape

    # --- online logsumexp update for this class chunk ---------------------
    chunk_max = jnp.max(logits, axis=1, keepdims=True)     # (TN, 1)
    m_new = jnp.maximum(m_s[...], chunk_max)
    l_s[...] = (l_s[...] * jnp.exp(m_s[...] - m_new)
                + jnp.sum(jnp.exp(logits - m_new), axis=1, keepdims=True))
    m_s[...] = m_new

    # --- gather logits[row, target[row]] for targets that fall in this chunk
    col_ids = j * tc + jax.lax.broadcasted_iota(jnp.int32, (tn, tc), 1)
    p_s[...] += jnp.sum(jnp.where(col_ids == tgt, logits, 0.0),
                        axis=1, keepdims=True)

    # --- finalize this row tile: write lane-dense partial (sum, count) -----
    @pl.when(j == n_class_tiles - 1)
    def _():
        lse = m_s[...] + jnp.log(l_s[...])                  # (TN, 1)
        per_row = lse - p_s[...]                            # NLL per row
        valid = (tgt != IGNORE_INDEX).astype(jnp.float32)   # ignore_index mask
        part_sum = jnp.sum(per_row * valid)
        part_cnt = jnp.sum(valid)

        lane = jax.lax.broadcasted_iota(jnp.int32, (8, 128), 1)
        row = jax.lax.broadcasted_iota(jnp.int32, (8, 128), 0)
        out_ref[...] = jnp.where((row == 0) & (lane == 0), part_sum,
                                 jnp.where((row == 0) & (lane == 1),
                                           part_cnt, 0.0))


@functools.partial(jax.jit, static_argnames=("block_bytes", "class_tile"))
def cross_entropy_loss(logits, targets, *, block_bytes=4 * 1024 * 1024,
                       class_tile=None):
    """logits: (N, C) float32/bfloat16, targets: (N,) int -> scalar f32 loss."""
    n, c = logits.shape
    itemsize = jnp.dtype(logits.dtype).itemsize

    # ---- class tiling: full C unless the vocabulary is large --------------
    if class_tile is None:
        class_tile = c if c <= 8192 else 2048
    if class_tile >= c:
        class_tile = c
        c_padded = c
    else:
        class_tile = max(128, (class_tile // 128) * 128)
        c_padded = pl.cdiv(c, class_tile) * class_tile

    # ---- row tiling: biggest multiple of 8 under the block-byte budget ----
    max_rows = max(8, block_bytes // max(1, class_tile * itemsize))
    row_tile = max(8, min(1024, (max_rows // 8) * 8))
    row_tile = min(row_tile, ((n + 7) // 8) * 8)            # don't over-pad N
    n_padded = pl.cdiv(n, row_tile) * row_tile

    # ---- pad inputs (padding never contributes to sum or count) -----------
    lg = logits
    if c_padded > c:
        lg = jnp.pad(lg, ((0, 0), (0, c_padded - c)),
                     constant_values=jnp.finfo(lg.dtype).min)
    if n_padded > n:
        lg = jnp.pad(lg, ((0, n_padded - n), (0, 0)))        # zeros, masked out
    tg = targets.astype(jnp.int32).reshape(n, 1)
    if n_padded > n:
        tg = jnp.pad(tg, ((0, n_padded - n), (0, 0)),
                     constant_values=IGNORE_INDEX)

    n_row_tiles = n_padded // row_tile
    n_class_tiles = c_padded // class_tile

    # ---- VMEM budget: explicit, clamped so it is valid on v7x (64 MiB) ----
    logits_block_bytes = row_tile * class_tile * itemsize
    vmem_limit = int(min(64 * 1024 * 1024,
                         max(32 * 1024 * 1024,
                             4 * logits_block_bytes + (2 << 20))))

    partials = pl.pallas_call(
        _ce_kernel,
        out_shape=jax.ShapeDtypeStruct((n_row_tiles * 8, 128), jnp.float32),
        grid_spec=pltpu.PrefetchScalarGridSpec(
            num_scalar_prefetch=0,
            grid=(n_row_tiles, n_class_tiles),
            in_specs=[
                pl.BlockSpec((row_tile, class_tile), lambda i, j: (i, j)),
                pl.BlockSpec((row_tile, 1), lambda i, j: (i, 0)),
            ],
            out_specs=pl.BlockSpec((8, 128), lambda i, j: (i, 0)),
            scratch_shapes=[
                pltpu.VMEM((row_tile, 1), jnp.float32),   # running max
                pltpu.VMEM((row_tile, 1), jnp.float32),   # running sum-exp
                pltpu.VMEM((row_tile, 1), jnp.float32),   # gathered target logit
            ],
        ),
        compiler_params=pltpu.CompilerParams(
            dimension_semantics=("parallel", "arbitrary"),
            vmem_limit_bytes=vmem_limit,
        ),
    )(lg, tg)

    # reduction='mean': sum of valid per-row losses / number of valid rows.
    total = jnp.sum(partials[:, 0])
    count = jnp.sum(partials[:, 1])
    return total / count


def _reference(logits, targets):
    """Pure-JAX reference matching torch.nn.CrossEntropyLoss semantics."""
    logp = jax.nn.log_softmax(logits.astype(jnp.float32), axis=1)
    valid = targets != IGNORE_INDEX
    safe_t = jnp.where(valid, targets, 0)
    per = -jnp.take_along_axis(logp, safe_t[:, None], axis=1)[:, 0]
    per = jnp.where(valid, per, 0.0)
    return jnp.sum(per) / jnp.sum(valid.astype(jnp.float32))


if __name__ == "__main__":
    key = jax.random.PRNGKey(0)
    k1, k2, k3, k4, k5, k6 = jax.random.split(key, 6)

    # 1) basic: aligned shapes, f32, a couple of ignored rows.
    N, C = 16, 32
    logits = jax.random.normal(k1, (N, C), dtype=jnp.float32)
    targets = jax.random.randint(k2, (N,), 0, C, dtype=jnp.int32)
    targets = targets.at[3].set(IGNORE_INDEX).at[11].set(IGNORE_INDEX)
    loss = cross_entropy_loss(logits, targets)
    jax.block_until_ready(loss)
    ref = _reference(logits, targets)
    assert jnp.allclose(loss, ref, rtol=1e-5, atol=1e-5), (loss, ref)

    # 2) non-divisible N (row padding path), f32.
    N2, C2 = 13, 200
    logits2 = jax.random.normal(k3, (N2, C2), dtype=jnp.float32)
    targets2 = jax.random.randint(k4, (N2,), 0, C2, dtype=jnp.int32)
    targets2 = targets2.at[0].set(IGNORE_INDEX)
    loss2 = cross_entropy_loss(logits2, targets2)
    jax.block_until_ready(loss2)
    ref2 = _reference(logits2, targets2)
    assert jnp.allclose(loss2, ref2, rtol=1e-5, atol=1e-5), (loss2, ref2)

    # 3) class chunking (streaming logsumexp + class padding), bf16 inputs.
    N3, C3 = 16, 300
    logits3 = jax.random.normal(k5, (N3, C3), dtype=jnp.bfloat16)
    targets3 = jax.random.randint(k6, (N3,), 0, C3, dtype=jnp.int32)
    targets3 = targets3.at[7].set(IGNORE_INDEX)
    loss3 = cross_entropy_loss(logits3, targets3, class_tile=128)
    jax.block_until_ready(loss3)
    ref3 = _reference(logits3, targets3)
    assert jnp.allclose(loss3, ref3, rtol=1e-4, atol=1e-4), (loss3, ref3)

    print("KERNEL_OK")
</pallas_src>

<mosaic_0001>
module attributes {stable_mosaic.version = 11 : i64} {
  func.func @_ce_kernel(%arg0: i32, %arg1: i32, %arg2: memref<16x32xf32, #tpu.memory_space<vmem>>, %arg3: memref<16x1xi32, #tpu.memory_space<vmem>>, %arg4: memref<8x128xf32, #tpu.memory_space<vmem>>, %arg5: memref<16x1xf32, #tpu.memory_space<vmem>>, %arg6: memref<16x1xf32, #tpu.memory_space<vmem>>, %arg7: memref<16x1xf32, #tpu.memory_space<vmem>>) attributes {dimension_semantics = [#tpu.dimension_semantics<parallel>, #tpu.dimension_semantics<arbitrary>], iteration_bounds = array<i64: 1, 1>, scalar_prefetch = 0 : i64, scratch_operands = 3 : i64, tpu.core_type = #tpu.core_type<tc>, window_params = [{transform_indices = @transform_0, window_bounds = array<i64: 16, 32>}, {transform_indices = @transform_1, window_bounds = array<i64: 16, 1>}, {transform_indices = @transform_2, window_bounds = array<i64: 8, 128>}]} {
    %c0_i32 = arith.constant 0 : i32
    %0 = arith.cmpi eq, %arg1, %c0_i32 : i32
    %1 = arith.extui %0 : i1 to i32
    %c0_i32_0 = arith.constant 0 : i32
    %2 = arith.cmpi ne, %1, %c0_i32_0 : i32
    scf.if %2 {
      %cst_23 = arith.constant 0xFF800000 : f32
      %38 = vector.broadcast %cst_23 : f32 to vector<16x1xf32>
      %c0_24 = arith.constant 0 : index
      %c0_25 = arith.constant 0 : index
      %39 = vector.load %arg5[%c0_24, %c0_25] : memref<16x1xf32, #tpu.memory_space<vmem>>, vector<16x1xf32>
      tpu.vector_store %arg5[%c0_24, %c0_25], %38 {strides = array<i32>} : memref<16x1xf32, #tpu.memory_space<vmem>>, vector<16x1xf32>,
      %cst_26 = arith.constant 0.000000e+00 : f32
      %40 = vector.broadcast %cst_26 : f32 to vector<16x1xf32>
      %c0_27 = arith.constant 0 : index
      %c0_28 = arith.constant 0 : index
      %41 = vector.load %arg6[%c0_27, %c0_28] : memref<16x1xf32, #tpu.memory_space<vmem>>, vector<16x1xf32>
      tpu.vector_store %arg6[%c0_27, %c0_28], %40 {strides = array<i32>} : memref<16x1xf32, #tpu.memory_space<vmem>>, vector<16x1xf32>,
      %cst_29 = arith.constant 0.000000e+00 : f32
      %42 = vector.broadcast %cst_29 : f32 to vector<16x1xf32>
      %c0_30 = arith.constant 0 : index
      %c0_31 = arith.constant 0 : index
      %43 = vector.load %arg7[%c0_30, %c0_31] : memref<16x1xf32, #tpu.memory_space<vmem>>, vector<16x1xf32>
      tpu.vector_store %arg7[%c0_30, %c0_31], %42 {strides = array<i32>} : memref<16x1xf32, #tpu.memory_space<vmem>>, vector<16x1xf32>,
    } else {
    }
    %c0 = arith.constant 0 : index
    %c0_1 = arith.constant 0 : index
    %3 = vector.load %arg2[%c0, %c0_1] : memref<16x32xf32, #tpu.memory_space<vmem>>, vector<16x32xf32>
    %c0_2 = arith.constant 0 : index
    %c0_3 = arith.constant 0 : index
    %4 = vector.load %arg3[%c0_2, %c0_3] : memref<16x1xi32, #tpu.memory_space<vmem>>, vector<16x1xi32>
    %cst = arith.constant dense<0xFF800000> : vector<16xf32>
    %5 = vector.multi_reduction <maximumf>, %3, %cst [1] : vector<16x32xf32> to vector<16xf32>
    %6 = vector.shape_cast %5 : vector<16xf32> to vector<16x1xf32>
    %c0_4 = arith.constant 0 : index
    %c0_5 = arith.constant 0 : index
    %7 = vector.load %arg5[%c0_4, %c0_5] : memref<16x1xf32, #tpu.memory_space<vmem>>, vector<16x1xf32>
    %8 = arith.maximumf %7, %6 : vector<16x1xf32>
    %c0_6 = arith.constant 0 : index
    %c0_7 = arith.constant 0 : index
    %9 = vector.load %arg6[%c0_6, %c0_7] : memref<16x1xf32, #tpu.memory_space<vmem>>, vector<16x1xf32>
    %c0_8 = arith.constant 0 : index
    %c0_9 = arith.constant 0 : index
    %10 = vector.load %arg5[%c0_8, %c0_9] : memref<16x1xf32, #tpu.memory_space<vmem>>, vector<16x1xf32>
    %11 = arith.subf %10, %8 : vector<16x1xf32>
    %12 = math.exp %11 : vector<16x1xf32>
    %13 = arith.mulf %9, %12 : vector<16x1xf32>
    %14 = vector.broadcast %8 : vector<16x1xf32> to vector<16x32xf32>
    %15 = arith.subf %3, %14 : vector<16x32xf32>
    %16 = math.exp %15 : vector<16x32xf32>
    %cst_10 = arith.constant dense<0.000000e+00> : vector<16xf32>
    %17 = vector.multi_reduction <add>, %16, %cst_10 [1] : vector<16x32xf32> to vector<16xf32>
    %18 = vector.shape_cast %17 : vector<16xf32> to vector<16x1xf32>
    %19 = arith.addf %13, %18 : vector<16x1xf32>
    %c0_11 = arith.constant 0 : index
    %c0_12 = arith.constant 0 : index
    %20 = vector.load %arg6[%c0_11, %c0_12] : memref<16x1xf32, #tpu.memory_space<vmem>>, vector<16x1xf32>
    tpu.vector_store %arg6[%c0_11, %c0_12], %19 {strides = array<i32>} : memref<16x1xf32, #tpu.memory_space<vmem>>, vector<16x1xf32>,
    %c0_13 = arith.constant 0 : index
    %c0_14 = arith.constant 0 : index
    %21 = vector.load %arg5[%c0_13, %c0_14] : memref<16x1xf32, #tpu.memory_space<vmem>>, vector<16x1xf32>
    tpu.vector_store %arg5[%c0_13, %c0_14], %8 {strides = array<i32>} : memref<16x1xf32, #tpu.memory_space<vmem>>, vector<16x1xf32>,
    %c32_i32 = arith.constant 32 : i32
    %22 = arith.muli %arg1, %c32_i32 : i32
    %23 = tpu.iota {dimensions = array<i32: 1>} : vector<16x32xi32>
    %24 = vector.broadcast %22 : i32 to vector<16x32xi32>
    %25 = arith.addi %24, %23 : vector<16x32xi32>
    %c0_15 = arith.constant 0 : index
    %c0_16 = arith.constant 0 : index
    %26 = vector.load %arg7[%c0_15, %c0_16] : memref<16x1xf32, #tpu.memory_space<vmem>>, vector<16x1xf32>
    %27 = vector.broadcast %4 : vector<16x1xi32> to vector<16x32xi32>
    %28 = arith.cmpi eq, %25, %27 : vector<16x32xi32>
    %cst_17 = arith.constant 0.000000e+00 : f32
    %29 = vector.broadcast %cst_17 : f32 to vector<16x32xf32>
    %30 = arith.select %28, %3, %29 : vector<16x32xi1>, vector<16x32xf32>
    %cst_18 = arith.constant dense<0.000000e+00> : vector<16xf32>
    %31 = vector.multi_reduction <add>, %30, %cst_18 [1] : vector<16x32xf32> to vector<16xf32>
    %32 = vector.shape_cast %31 : vector<16xf32> to vector<16x1xf32>
    %33 = arith.addf %26, %32 : vector<16x1xf32>
    %c0_19 = arith.constant 0 : index
    %c0_20 = arith.constant 0 : index
    %34 = vector.load %arg7[%c0_19, %c0_20] : memref<16x1xf32, #tpu.memory_space<vmem>>, vector<16x1xf32>
    tpu.vector_store %arg7[%c0_19, %c0_20], %33 {strides = array<i32>} : memref<16x1xf32, #tpu.memory_space<vmem>>, vector<16x1xf32>,
    %c0_i32_21 = arith.constant 0 : i32
    %35 = arith.cmpi eq, %arg1, %c0_i32_21 : i32
    %36 = arith.extui %35 : i1 to i32
    %c0_i32_22 = arith.constant 0 : i32
    %37 = arith.cmpi ne, %36, %c0_i32_22 : i32
    scf.if %37 {
      %c0_23 = arith.constant 0 : index
      %c0_24 = arith.constant 0 : index
      %38 = vector.load %arg5[%c0_23, %c0_24] : memref<16x1xf32, #tpu.memory_space<vmem>>, vector<16x1xf32>
      %c0_25 = arith.constant 0 : index
      %c0_26 = arith.constant 0 : index
      %39 = vector.load %arg6[%c0_25, %c0_26] : memref<16x1xf32, #tpu.memory_space<vmem>>, vector<16x1xf32>
      %40 = math.log %39 : vector<16x1xf32>
      %41 = arith.addf %38, %40 : vector<16x1xf32>
      %c0_27 = arith.constant 0 : index
      %c0_28 = arith.constant 0 : index
      %42 = vector.load %arg7[%c0_27, %c0_28] : memref<16x1xf32, #tpu.memory_space<vmem>>, vector<16x1xf32>
      %43 = arith.subf %41, %42 : vector<16x1xf32>
      %c-100_i32 = arith.constant -100 : i32
      %44 = vector.broadcast %c-100_i32 : i32 to vector<16x1xi32>
      %45 = arith.cmpi ne, %4, %44 : vector<16x1xi32>
      %46 = arith.extui %45 : vector<16x1xi1> to vector<16x1xi32>
      %47 = arith.sitofp %46 : vector<16x1xi32> to vector<16x1xf32>
      %48 = arith.mulf %43, %47 : vector<16x1xf32>
      %49 = vector.shape_cast %48 : vector<16x1xf32> to vector<1x16x1xf32>
      %cst_29 = arith.constant dense<0.000000e+00> : vector<1xf32>
      %50 = vector.multi_reduction <add>, %49, %cst_29 [1, 2] : vector<1x16x1xf32> to vector<1xf32>
      %51 = vector.shape_cast %50 : vector<1xf32> to vector<1x1x1xf32>
      %52 = vector.extract %51[0, 0, 0] : f32 from vector<1x1x1xf32>
      %53 = vector.shape_cast %47 : vector<16x1xf32> to vector<1x16x1xf32>
      %cst_30 = arith.constant dense<0.000000e+00> : vector<1xf32>
      %54 = vector.multi_reduction <add>, %53, %cst_30 [1, 2] : vector<1x16x1xf32> to vector<1xf32>
      %55 = vector.shape_cast %54 : vector<1xf32> to vector<1x1x1xf32>
      %56 = vector.extract %55[0, 0, 0] : f32 from vector<1x1x1xf32>
      %57 = tpu.iota {dimensions = array<i32: 1>} : vector<8x128xi32>
      %58 = tpu.iota {dimensions = array<i32: 0>} : vector<8x128xi32>
      %c0_i32_31 = arith.constant 0 : i32
      %59 = vector.broadcast %c0_i32_31 : i32 to vector<8x128xi32>
      %60 = arith.cmpi eq, %58, %59 : vector<8x128xi32>
      %c0_i32_32 = arith.constant 0 : i32
      %61 = vector.broadcast %c0_i32_32 : i32 to vector<8x128xi32>
      %62 = arith.cmpi eq, %57, %61 : vector<8x128xi32>
      %63 = arith.andi %60, %62 : vector<8x128xi1>
      %c0_i32_33 = arith.constant 0 : i32
      %64 = vector.broadcast %c0_i32_33 : i32 to vector<8x128xi32>
      %65 = arith.cmpi eq, %58, %64 : vector<8x128xi32>
      %c1_i32 = arith.constant 1 : i32
      %66 = vector.broadcast %c1_i32 : i32 to vector<8x128xi32>
      %67 = arith.cmpi eq, %57, %66 : vector<8x128xi32>
      %68 = arith.andi %65, %67 : vector<8x128xi1>
      %cst_34 = arith.constant 0.000000e+00 : f32
      %69 = vector.broadcast %56 : f32 to vector<8x128xf32>
      %70 = vector.broadcast %cst_34 : f32 to vector<8x128xf32>
      %71 = arith.select %68, %69, %70 : vector<8x128xi1>, vector<8x128xf32>
      %72 = vector.broadcast %52 : f32 to vector<8x128xf32>
      %73 = arith.select %63, %72, %71 : vector<8x128xi1>, vector<8x128xf32>
      %c0_35 = arith.constant 0 : index
      %c0_36 = arith.constant 0 : index
      %74 = vector.load %arg4[%c0_35, %c0_36] : memref<8x128xf32, #tpu.memory_space<vmem>>, vector<8x128xf32>
      tpu.vector_store %arg4[%c0_35, %c0_36], %73 {strides = array<i32>} : memref<8x128xf32, #tpu.memory_space<vmem>>, vector<8x128xf32>,
    } else {
    }
    return
  }
  func.func @transform_0(%arg0: i32, %arg1: i32) -> (i32, i32) {
    %c0_i32 = arith.constant 0 : i32
    return %arg0, %arg1 : i32, i32
  }
  func.func @transform_1(%arg0: i32, %arg1: i32) -> (i32, i32) {
    %c0_i32 = arith.constant 0 : i32
    %c0_i32_0 = arith.constant 0 : i32
    return %arg0, %c0_i32 : i32, i32
  }
  func.func @transform_2(%arg0: i32, %arg1: i32) -> (i32, i32) {
    %c0_i32 = arith.constant 0 : i32
    %c0_i32_0 = arith.constant 0 : i32
    return %arg0, %c0_i32 : i32, i32
  }
}

</mosaic_0001>

<llo_original>
// kernel: cross_entropy_loss.1
$region0: #{cross_entropy_loss.1}
  #allocation0 [shape = 'u32[]', space=smem, size = 0x4, offset = 0x4, fixed_abs, tag = 'smem constant byte address 0x4 - core index']
  #allocation1 [shape = 'u32[144,128]{1,0:T(1,128)}', space=vmem, size = 0x12000, scoped, tag = 'internal scratch']
  #allocation2 [shape = 'f32[16,1]{1,0:T(8,128)}', space=vmem, size = 0x2000, scoped, tag = 'scratch operand']
  #allocation3 [shape = 'f32[16,1]{1,0:T(8,128)}', space=vmem, size = 0x2000, scoped, tag = 'scratch operand']
  #allocation4 [shape = 'f32[16,1]{1,0:T(8,128)}', space=vmem, size = 0x2000, scoped, tag = 'scratch operand']
  %s0 = inlined_call_operand.vmem [shape: f32[16,32], index: 0, kind: input, shape index: {}]
  %s1 = inlined_call_operand.vmem [shape: s32[16,1], index: 1, kind: input, shape index: {}]
  %s2 = inlined_call_operand.vmem [shape: f32[8,128], index: 2, kind: output, shape index: {}]
  %s3 = sld [smem:[#allocation0]]
  $region26: #{cross_entropy_loss.1} parent=0
    _
  %s5 = ssub.s32 1, %s3
  %s6 = scalar_select 0, %s5, %s3
  // Predicated region
  $region2: #{cross_entropy_loss.1} parent=0 // pred_check
    _
  $region3: #{cross_entropy_loss.1} parent=0 // pred_check_branch
    %8 = sbr.rel (0) target = $region5
  $region4: #{cross_entropy_loss.1} parent=0 // pred_region
    _
  $region5: #{cross_entropy_loss.1} parent=0 // pred_fallthru
    _
  // Predicated region
  $region6: #{cross_entropy_loss.1} parent=0 // pred_check
    _
  $region7: #{cross_entropy_loss.1} parent=0 // pred_check_branch
    %10 = sbr.rel (0) target = $region9
  $region8: #{cross_entropy_loss.1} parent=0 // pred_region
    _
  $region9: #{cross_entropy_loss.1} parent=0 // pred_fallthru
    _
  %p11 = scmp.eq.s32.totalorder 0, 0
  // Predicated region
  $region10: #{cross_entropy_loss.1} parent=0 // pred_check
    %p12 = pneg %p11
  $region11: #{cross_entropy_loss.1} parent=0 // pred_check_branch
    %14 = sbr.rel (%p12) target = $region13
  $region12: #{cross_entropy_loss.1} parent=0 // pred_region
    %vm15 = vcmask 7168
    %16 = vst.msk [vmem:[#allocation2] sm:$0xff] %vm15, -inf
    %17 = vst.msk [vmem:[#allocation2 + $0x8] sm:$0xff] %vm15, -inf
    %18 = vst.msk [vmem:[#allocation3] sm:$0xff] %vm15, 0.0
    %19 = vst.msk [vmem:[#allocation3 + $0x8] sm:$0xff] %vm15, 0.0
    %20 = vst.msk [vmem:[#allocation4] sm:$0xff] %vm15, 0.0
    %21 = vst.msk [vmem:[#allocation4 + $0x8] sm:$0xff] %vm15, 0.0
  $region13: #{cross_entropy_loss.1} parent=0 // pred_fallthru
    _
  %v22 = vld [vmem:[%s0] sm:$0xff]
  %v23 = vld [vmem:[%s0 + $0x8] sm:$0xff]
  %v24 = vld [vmem:[%s1] sm:$0xff]
  %v25 = vld [vmem:[%s1 + $0x8] sm:$0xff]
  %vm26 = vcmask 261120
  %v27 = vsel %vm26, %v22, -inf
  %28 = vmax.xlane.f32.xlu0 %v27
  %v29 = vpop.xlane.xlu0 %28
  %v30 = vsel %vm26, %v23, -inf
  %31 = vmax.xlane.f32.xlu0 %v30
  %v32 = vpop.xlane.xlu0 %31
  %v33 = vld [vmem:[#allocation2] sm:$0xff]
  %v34 = vld [vmem:[#allocation2 + $0x8] sm:$0xff]
  %v35 = vmax.f32 %v33, %v29
  %v36 = vmax.f32 %v34, %v32
  %v37 = vld [vmem:[#allocation3] sm:$0xff]
  %v38 = vld [vmem:[#allocation3 + $0x8] sm:$0xff]
  %v39 = vsub.f32 %v33, %v35
  %v40 = vsub.f32 %v34, %v36
  %v41 = vmul.f32 %v39, 1.442695
  %v42 = vpow.pop %v41
  %v43 = vmul.f32 %v40, 1.442695
  %v44 = vpow.pop %v43
  %v45 = vmul.f32 %v37, %v42
  %v46 = vmul.f32 %v38, %v44
  %48 = vset.pattern.permute.xlu0 0
  %49 = vperm.xlu0 %48, %v35
  %v50 = vpop.permute.xlu0 %49
  %53 = vset.pattern.permute.xlu0 0
  %54 = vperm.xlu0 %53, %v36
  %v55 = vpop.permute.xlu0 %54
  %v57 = vsub.f32 %v22, %v50
  %v58 = vsub.f32 %v23, %v55
  %v59 = vmul.f32 %v57, 1.442695
  %v60 = vpow.pop %v59
  %v61 = vmul.f32 %v58, 1.442695
  %v62 = vpow.pop %v61
  %v63 = vsel %vm26, %v60, 0.0
  %64 = vadd.xlane.f32.xlu0 %v63
  %v65 = vpop.xlane.xlu0 %64
  %v66 = vsel %vm26, %v62, 0.0
  %67 = vadd.xlane.f32.xlu0 %v66
  %v68 = vpop.xlane.xlu0 %67
  %v69 = vadd.f32 %v45, %v65
  %v70 = vadd.f32 %v46, %v68
  %vm71 = vcmask 7168
  %72 = vst.msk [vmem:[#allocation3] sm:$0xff] %vm71, %v69
  %73 = vst.msk [vmem:[#allocation3 + $0x8] sm:$0xff] %vm71, %v70
  %74 = vst.msk [vmem:[#allocation2] sm:$0xff] %vm71, %v35
  %75 = vst.msk [vmem:[#allocation2 + $0x8] sm:$0xff] %vm71, %v36
  %s76 = smul.u32 0, 32
  %v77 = vlaneseq
  %v78 = vand.u32 %v77, 127
  %v79 = vstv %s76
  %v80 = vadd.s32 %v79, %v78
  %v81 = vld [vmem:[#allocation4] sm:$0xff]
  %v82 = vld [vmem:[#allocation4 + $0x8] sm:$0xff]
  %83 = vset.pattern.permute.xlu0 0
  %84 = vperm.xlu0 %83, %v24
  %v85 = vpop.permute.xlu0 %84
  %86 = vset.pattern.permute.xlu0 0
  %87 = vperm.xlu0 %86, %v25
  %v88 = vpop.permute.xlu0 %87
  %vm89 = vcmp.eq.s32.totalorder %v80, %v85
  %vm90 = vcmp.eq.s32.totalorder %v80, %v88
  %v91 = vsel %vm89, %v22, 0.0
  %v92 = vsel %vm90, %v23, 0.0
  %v93 = vsel %vm26, %v91, 0.0
  %94 = vadd.xlane.f32.xlu0 %v93
  %v95 = vpop.xlane.xlu0 %94
  %v96 = vsel %vm26, %v92, 0.0
  %97 = vadd.xlane.f32.xlu0 %v96
  %v98 = vpop.xlane.xlu0 %97
  %v99 = vadd.f32 %v81, %v95
  %v100 = vadd.f32 %v82, %v98
  %101 = vst.msk [vmem:[#allocation4] sm:$0xff] %vm71, %v99
  %102 = vst.msk [vmem:[#allocation4 + $0x8] sm:$0xff] %vm71, %v100
  // Predicated region
  $region14: #{cross_entropy_loss.1} parent=0 // pred_check
    %p103 = pneg %p11
  $region15: #{cross_entropy_loss.1} parent=0 // pred_check_branch
    %105 = sbr.rel (%p103) target = $region17
  $region16: #{cross_entropy_loss.1} parent=0 // pred_region
    %v106 = vld [vmem:[#allocation2] sm:$0xff]
    %v107 = vld [vmem:[#allocation2 + $0x8] sm:$0xff]
    %v108 = vld [vmem:[#allocation3] sm:$0xff]
    %v109 = vld [vmem:[#allocation3 + $0x8] sm:$0xff]
    %v110 = vlog2.pop %v108
    %v111 = vmul.f32 %v110, 0.6931472
    %v112 = vlog2.pop %v109
    %v113 = vmul.f32 %v112, 0.6931472
    %v114 = vadd.f32 %v106, %v111
    %v115 = vadd.f32 %v107, %v113
    %v116 = vld [vmem:[#allocation4] sm:$0xff]
    %v117 = vld [vmem:[#allocation4 + $0x8] sm:$0xff]
    %v118 = vsub.f32 %v114, %v116
    %v119 = vsub.f32 %v115, %v117
    %vm120 = vcmp.ne.s32.totalorder %v24, 4294967196
    %vm121 = vcmp.ne.s32.totalorder %v25, 4294967196
    %v122 = vsel %vm120, 1, 0
    %v123 = vsel %vm121, 1, 0
    %v124 = vcvt.s32.f32 %v122
    %v125 = vcvt.s32.f32 %v123
    %v126 = vmul.f32 %v118, %v124
    %v127 = vmul.f32 %v119, %v125
    %v128 = vsel %vm71, %v126, 0.0
    %v129 = vsel %vm71, %v127, 0.0
    %v130 = vadd.f32 %v128, %v129
    %131 = vadd.xlane.f32.xlu0 %v130
    %v132 = vpop.xlane.xlu0 %131
    %v133 = vrot.slane %v132, 4
    %v134 = vadd.f32 %v132, %v133
    %v135 = vrot.slane %v134, 2
    %v136 = vadd.f32 %v134, %v135
    %v137 = vrot.slane %v136, 1
    %v138 = vadd.f32 %v136, %v137
    %s139 = vtos %v138
    %v140 = vsel %vm71, %v124, 0.0
    %v141 = vsel %vm71, %v125, 0.0
    %v142 = vadd.f32 %v140, %v141
    %143 = vadd.xlane.f32.xlu0 %v142
    %v144 = vpop.xlane.xlu0 %143
    %v145 = vrot.slane %v144, 4
    %v146 = vadd.f32 %v144, %v145
    %v147 = vrot.slane %v146, 2
    %v148 = vadd.f32 %v146, %v147
    %v149 = vrot.slane %v148, 1
    %v150 = vadd.f32 %v148, %v149
    %s151 = vtos %v150
    %v152 = vlaneseq
    %v153 = vshrl.u32 %v152, 7
    %vm154 = vcmp.eq.s32.totalorder %v153, 0
    %vm155 = vcmp.eq.s32.totalorder %v78, 0
    %vm156 = vmand %vm154, %vm155
    %vm157 = vcmp.eq.s32.totalorder %v78, 1
    %vm158 = vmand %vm154, %vm157
    %v159 = vstv %s151
    %v160 = vsel %vm158, %v159, 0.0
    %v161 = vstv %s139
    %v162 = vsel %vm156, %v161, %v160
    %163 = vst [vmem:[%s2] sm:$0xff] %v162
  $region17: #{cross_entropy_loss.1} parent=0 // pred_fallthru
    _
  // Predicated region
  $region18: #{cross_entropy_loss.1} parent=0 // pred_check
    _
  $region19: #{cross_entropy_loss.1} parent=0 // pred_check_branch
    %165 = sbr.rel (0) target = $region21
  $region20: #{cross_entropy_loss.1} parent=0 // pred_region
    _
  $region21: #{cross_entropy_loss.1} parent=0 // pred_fallthru
    _
  // Predicated region
  $region22: #{cross_entropy_loss.1} parent=0 // pred_check
    _
  $region23: #{cross_entropy_loss.1} parent=0 // pred_check_branch
    %167 = sbr.rel (0) target = $region25
  $region24: #{cross_entropy_loss.1} parent=0 // pred_region
    _
  $region25: #{cross_entropy_loss.1} parent=0 // pred_fallthru
    _

</llo_original>
